<compile_context>
chip_gen: v6e
topology: v6e:2x2x1
jax: 0.10.0
libtpu: 0.0.40
codegen_flags: <defaults>
</compile_context>

<pallas_src>
import jax
import jax.numpy as jnp
from jax.experimental import pallas as pl
from jax.experimental.pallas import tpu as pltpu


def _round_up(n, m):
    return ((n + m - 1) // m) * m


def _cdiv(a, b):
    return (a + b - 1) // b


# -----------------------------------------------------------------------------
# Kernel
# -----------------------------------------------------------------------------
def _policy_kernel(x_ref, w1_ref, b1_ref, w2_ref, b2_ref, wh_ref, bh_ref,
                   mask_ref, out_ref):
    mxu_dtype = w1_ref.dtype

    # hidden layer 1 + relu (MXU dot, f32 accumulate; bias/activation in f32)
    h = jnp.dot(x_ref[...].astype(mxu_dtype), w1_ref[...],
                preferred_element_type=jnp.float32)
    h = jnp.maximum(h + b1_ref[...], 0.0)

    # hidden layer 2 + relu
    h = jnp.dot(h.astype(mxu_dtype), w2_ref[...],
                preferred_element_type=jnp.float32)
    h = jnp.maximum(h + b2_ref[...], 0.0)

    # fused mu|std head: one matmul, one bias add
    s = jnp.dot(h.astype(mxu_dtype), wh_ref[...],
                preferred_element_type=jnp.float32)
    s = s + bh_ref[...]

    # Both activations on the whole vreg (EUP work), selected by the
    # precomputed resident lane mask (mu lanes first, std lanes second).
    # TODO(synk): for action_dim >= 64, pad each head to a 128-lane multiple
    # and replace this select with two static slices (halves EUP work and
    # gives unmasked full-vreg stores); at action_dim=8 it is not worth it.
    mu_full = jnp.tanh(s)
    std_full = jnp.maximum(s, 0.0) + jnp.log1p(jnp.exp(-jnp.abs(s)))
    out_ref[...] = jnp.where(mask_ref[...] > 0.5, mu_full,
                             std_full).astype(out_ref.dtype)


# -----------------------------------------------------------------------------
# One-time parameter preparation (hoisted out of the forward path)
# -----------------------------------------------------------------------------
def prepare_params(params, *, mxu_dtype=jnp.float32):
    """Pack/cast PolicyNet params once.

    params: dict with w1,b1,w2,b2,wmu,bmu,wstd,bstd, weights stored (in, out).
    mxu_dtype: dtype of the MXU operands. jnp.float32 for exact semantics,
               jnp.bfloat16 for speed (valid on v5e/v6e/v7x; biases and all
               activation math stay f32).
    """
    action_dim = params["wmu"].shape[1]
    head_out = 2 * action_dim

    wh = jnp.concatenate([params["wmu"], params["wstd"]], axis=1)
    bh = jnp.concatenate([params["bmu"].reshape(1, -1),
                          params["bstd"].reshape(1, -1)], axis=1)
    lane = jnp.arange(head_out, dtype=jnp.int32)[None, :]
    mask = (lane < action_dim).astype(jnp.float32)   # 1.0 -> mu lane, 0.0 -> std

    return dict(
        w1=params["w1"].astype(mxu_dtype),
        b1=params["b1"].reshape(1, -1).astype(jnp.float32),
        w2=params["w2"].astype(mxu_dtype),
        b2=params["b2"].reshape(1, -1).astype(jnp.float32),
        wh=wh.astype(mxu_dtype),
        bh=bh.astype(jnp.float32),
        mask=mask,
    )


# -----------------------------------------------------------------------------
# Forward wrapper
# -----------------------------------------------------------------------------
def policy_net_forward(x, prepared, *, block_b=4096):
    """x: (B, state_dim) float32; prepared: output of prepare_params()."""
    B, state_dim = x.shape
    hidden_dim = prepared["w1"].shape[1]
    head_out = prepared["wh"].shape[1]
    action_dim = head_out // 2

    # Balanced batch tiling, multiple-of-8 tiles, >= 2 grid steps when B allows
    # (lets ("parallel",) shard across v7x's 2 TCs; one extra ~0.35us step is
    # harmless on single-TC v5e/v6e).
    block_b = max(8, (int(block_b) // 8) * 8)          # keep sublane rule
    min_steps = 2 if B >= 16 else 1
    steps = max(min_steps, _cdiv(B, block_b))
    bt = _round_up(_cdiv(B, steps), 8)
    Bp = _round_up(B, bt)
    grid = (Bp // bt,)

    x_in = x if Bp == B else jnp.pad(x, ((0, Bp - B), (0, 0)))

    # VMEM budget: single-buffered residents + double-buffered x/out tiles +
    # activation scratch headroom.
    w_itemsize = jnp.dtype(prepared["w1"].dtype).itemsize
    resident_bytes = ((state_dim * hidden_dim + hidden_dim * hidden_dim
                       + hidden_dim * head_out) * w_itemsize
                      + (2 * hidden_dim + 3 * head_out) * 4)
    tile_bytes = bt * state_dim * 4 + bt * head_out * 4
    scratch_bytes = 4 * bt * hidden_dim * 4
    vmem_limit = int(min(128 * 1024 * 1024,
                         max(32 * 1024 * 1024,
                             resident_bytes + 2 * tile_bytes + scratch_bytes
                             + (1 << 20))))

    flops = 2 * Bp * (state_dim * hidden_dim + hidden_dim * hidden_dim
                      + hidden_dim * head_out)
    transcendentals = 3 * Bp * head_out
    bytes_accessed = (Bp * state_dim * jnp.dtype(x.dtype).itemsize
                      + resident_bytes + Bp * head_out * 4)

    # Weights / biases / mask: whole-array VMEM-resident operands -> copied in
    # once, no per-step re-fetch, no double-buffering. Only x/out are pipelined.
    resident = pl.BlockSpec(memory_space=pltpu.MemorySpace.VMEM)

    out = pl.pallas_call(
        _policy_kernel,
        out_shape=jax.ShapeDtypeStruct((Bp, head_out), jnp.float32),
        grid=grid,
        in_specs=[
            pl.BlockSpec((bt, state_dim), lambda i: (i, 0)),   # x: batch-tiled
            resident,   # w1
            resident,   # b1
            resident,   # w2
            resident,   # b2
            resident,   # wh (mu|std fused)
            resident,   # bh
            resident,   # lane mask
        ],
        out_specs=pl.BlockSpec((bt, head_out), lambda i: (i, 0)),
        compiler_params=pltpu.CompilerParams(
            dimension_semantics=("parallel",),
            vmem_limit_bytes=vmem_limit),
        cost_estimate=pl.CostEstimate(
            flops=int(flops),
            transcendentals=int(transcendentals),
            bytes_accessed=int(bytes_accessed)),
    )(x_in, prepared["w1"], prepared["b1"], prepared["w2"], prepared["b2"],
      prepared["wh"], prepared["bh"], prepared["mask"])

    out = out[:B]
    return out[:, :action_dim], out[:, action_dim:]


# -----------------------------------------------------------------------------
# Init + pure-JAX reference (for correctness checks)
# -----------------------------------------------------------------------------
def init_params(key, state_dim, hidden_dim, action_dim):
    """Mimics nn.Linear's U(-1/sqrt(fan_in), 1/sqrt(fan_in)) init."""
    def linear(key, fan_in, fan_out):
        kw, kb = jax.random.split(key)
        bound = 1.0 / jnp.sqrt(fan_in)
        w = jax.random.uniform(kw, (fan_in, fan_out), jnp.float32, -bound, bound)
        b = jax.random.uniform(kb, (1, fan_out), jnp.float32, -bound, bound)
        return w, b

    k1, k2, k3, k4 = jax.random.split(key, 4)
    w1, b1 = linear(k1, state_dim, hidden_dim)
    w2, b2 = linear(k2, hidden_dim, hidden_dim)
    wmu, bmu = linear(k3, hidden_dim, action_dim)
    wstd, bstd = linear(k4, hidden_dim, action_dim)
    return dict(w1=w1, b1=b1, w2=w2, b2=b2,
                wmu=wmu, bmu=bmu, wstd=wstd, bstd=bstd)


def _reference_forward(x, p):
    h = jnp.maximum(x @ p["w1"] + p["b1"], 0.0)
    h = jnp.maximum(h @ p["w2"] + p["b2"], 0.0)
    mu = jnp.tanh(h @ p["wmu"] + p["bmu"])
    std = jax.nn.softplus(h @ p["wstd"] + p["bstd"])
    return mu, std


if __name__ == "__main__":
    state_dim, hidden_dim, action_dim = 16, 32, 8
    batch = 8

    root = jax.random.PRNGKey(0)
    k_x, k_p, k_x2 = jax.random.split(root, 3)
    x = jax.random.normal(k_x, (batch, state_dim), jnp.float32)
    params = init_params(k_p, state_dim, hidden_dim, action_dim)
    mu_ref, std_ref = _reference_forward(x, params)

    fwd = jax.jit(policy_net_forward)

    # Exact-semantics path (f32 MXU operands).
    prepared_f32 = prepare_params(params, mxu_dtype=jnp.float32)
    mu, std = fwd(x, prepared_f32)
    jax.block_until_ready((mu, std))
    assert mu.shape == (batch, action_dim) and std.shape == (batch, action_dim)
    assert jnp.allclose(mu, mu_ref, atol=1e-5, rtol=1e-5)
    assert jnp.allclose(std, std_ref, atol=1e-5, rtol=1e-5)

    # bf16-MXU path (valid on v5e/v6e/v7x; f32 accumulation -> small drift).
    prepared_bf16 = prepare_params(params, mxu_dtype=jnp.bfloat16)
    mu_b, std_b = fwd(x, prepared_bf16)
    jax.block_until_ready((mu_b, std_b))
    assert jnp.allclose(mu_b, mu_ref, atol=3e-2, rtol=3e-2)
    assert jnp.allclose(std_b, std_ref, atol=3e-2, rtol=3e-2)

    # Larger batch exercises balanced tiling, padding, and >= 2 grid steps.
    x2 = jax.random.normal(k_x2, (100, state_dim), jnp.float32)
    mu2, std2 = fwd(x2, prepared_f32)
    jax.block_until_ready((mu2, std2))
    mu2_ref, std2_ref = _reference_forward(x2, params)
    assert mu2.shape == (100, action_dim) and std2.shape == (100, action_dim)
    assert jnp.allclose(mu2, mu2_ref, atol=1e-5, rtol=1e-5)
    assert jnp.allclose(std2, std2_ref, atol=1e-5, rtol=1e-5)

    print("KERNEL_OK")
</pallas_src>

<mosaic_0001>
module attributes {stable_mosaic.version = 11 : i64} {
  func.func @_policy_kernel(%arg0: i32, %arg1: memref<8x16xf32, #tpu.memory_space<vmem>>, %arg2: memref<16x32xf32, #tpu.memory_space<vmem>>, %arg3: memref<1x32xf32, #tpu.memory_space<vmem>>, %arg4: memref<32x32xf32, #tpu.memory_space<vmem>>, %arg5: memref<1x32xf32, #tpu.memory_space<vmem>>, %arg6: memref<32x16xf32, #tpu.memory_space<vmem>>, %arg7: memref<1x16xf32, #tpu.memory_space<vmem>>, %arg8: memref<1x16xf32, #tpu.memory_space<vmem>>, %arg9: memref<8x16xf32, #tpu.memory_space<vmem>>) attributes {dimension_semantics = [#tpu.dimension_semantics<parallel>], iteration_bounds = array<i64: 1>, scalar_prefetch = 0 : i64, scratch_operands = 0 : i64, tpu.core_type = #tpu.core_type<tc>, window_params = [{transform_indices = @transform_0, window_bounds = array<i64: 8, 16>}, {pipeline_mode = #tpu.pipeline_mode<synchronous>, transform_indices = @transform_1, window_bounds = array<i64: 16, 32>}, {pipeline_mode = #tpu.pipeline_mode<synchronous>, transform_indices = @transform_2, window_bounds = array<i64: 1, 32>}, {pipeline_mode = #tpu.pipeline_mode<synchronous>, transform_indices = @transform_3, window_bounds = array<i64: 32, 32>}, {pipeline_mode = #tpu.pipeline_mode<synchronous>, transform_indices = @transform_4, window_bounds = array<i64: 1, 32>}, {pipeline_mode = #tpu.pipeline_mode<synchronous>, transform_indices = @transform_5, window_bounds = array<i64: 32, 16>}, {pipeline_mode = #tpu.pipeline_mode<synchronous>, transform_indices = @transform_6, window_bounds = array<i64: 1, 16>}, {pipeline_mode = #tpu.pipeline_mode<synchronous>, transform_indices = @transform_7, window_bounds = array<i64: 1, 16>}, {transform_indices = @transform_8, window_bounds = array<i64: 8, 16>}]} {
    %c0 = arith.constant 0 : index
    %c0_0 = arith.constant 0 : index
    %0 = vector.load %arg1[%c0, %c0_0] : memref<8x16xf32, #tpu.memory_space<vmem>>, vector<8x16xf32>
    %c0_1 = arith.constant 0 : index
    %c0_2 = arith.constant 0 : index
    %1 = vector.load %arg2[%c0_1, %c0_2] : memref<16x32xf32, #tpu.memory_space<vmem>>, vector<16x32xf32>
    %cst = arith.constant dense<0.000000e+00> : vector<8x32xf32>
    %2 = tpu.matmul %0, %1, %cst {dimension_numbers = #tpu.dot_dimension_numbers<[1], [0], [0], [1], [0, 0, 1, 1], [], []>} : vector<8x16xf32>, vector<16x32xf32>, vector<8x32xf32> -> vector<8x32xf32>
    %c0_3 = arith.constant 0 : index
    %c0_4 = arith.constant 0 : index
    %3 = vector.load %arg3[%c0_3, %c0_4] : memref<1x32xf32, #tpu.memory_space<vmem>>, vector<1x32xf32>
    %4 = vector.broadcast %3 : vector<1x32xf32> to vector<8x32xf32>
    %5 = arith.addf %2, %4 : vector<8x32xf32>
    %cst_5 = arith.constant 0.000000e+00 : f32
    %6 = vector.broadcast %cst_5 : f32 to vector<8x32xf32>
    %7 = arith.maximumf %5, %6 : vector<8x32xf32>
    %c0_6 = arith.constant 0 : index
    %c0_7 = arith.constant 0 : index
    %8 = vector.load %arg4[%c0_6, %c0_7] : memref<32x32xf32, #tpu.memory_space<vmem>>, vector<32x32xf32>
    %cst_8 = arith.constant dense<0.000000e+00> : vector<8x32xf32>
    %9 = tpu.matmul %7, %8, %cst_8 {dimension_numbers = #tpu.dot_dimension_numbers<[1], [0], [0], [1], [0, 0, 1, 1], [], []>} : vector<8x32xf32>, vector<32x32xf32>, vector<8x32xf32> -> vector<8x32xf32>
    %c0_9 = arith.constant 0 : index
    %c0_10 = arith.constant 0 : index
    %10 = vector.load %arg5[%c0_9, %c0_10] : memref<1x32xf32, #tpu.memory_space<vmem>>, vector<1x32xf32>
    %11 = vector.broadcast %10 : vector<1x32xf32> to vector<8x32xf32>
    %12 = arith.addf %9, %11 : vector<8x32xf32>
    %cst_11 = arith.constant 0.000000e+00 : f32
    %13 = vector.broadcast %cst_11 : f32 to vector<8x32xf32>
    %14 = arith.maximumf %12, %13 : vector<8x32xf32>
    %c0_12 = arith.constant 0 : index
    %c0_13 = arith.constant 0 : index
    %15 = vector.load %arg6[%c0_12, %c0_13] : memref<32x16xf32, #tpu.memory_space<vmem>>, vector<32x16xf32>
    %cst_14 = arith.constant dense<0.000000e+00> : vector<8x16xf32>
    %16 = tpu.matmul %14, %15, %cst_14 {dimension_numbers = #tpu.dot_dimension_numbers<[1], [0], [0], [1], [0, 0, 1, 1], [], []>} : vector<8x32xf32>, vector<32x16xf32>, vector<8x16xf32> -> vector<8x16xf32>
    %c0_15 = arith.constant 0 : index
    %c0_16 = arith.constant 0 : index
    %17 = vector.load %arg7[%c0_15, %c0_16] : memref<1x16xf32, #tpu.memory_space<vmem>>, vector<1x16xf32>
    %18 = vector.broadcast %17 : vector<1x16xf32> to vector<8x16xf32>
    %19 = arith.addf %16, %18 : vector<8x16xf32>
    %20 = math.tanh %19 : vector<8x16xf32>
    %cst_17 = arith.constant 0.000000e+00 : f32
    %21 = vector.broadcast %cst_17 : f32 to vector<8x16xf32>
    %22 = arith.maximumf %19, %21 : vector<8x16xf32>
    %23 = math.absf %19 : vector<8x16xf32>
    %cst_18 = arith.constant 0.000000e+00 : f32
    %24 = vector.broadcast %cst_18 : f32 to vector<8x16xf32>
    %25 = arith.subf %24, %23 : vector<8x16xf32>
    %26 = math.exp %25 : vector<8x16xf32>
    %27 = math.log1p %26 : vector<8x16xf32>
    %28 = arith.addf %22, %27 : vector<8x16xf32>
    %c0_19 = arith.constant 0 : index
    %c0_20 = arith.constant 0 : index
    %29 = vector.load %arg8[%c0_19, %c0_20] : memref<1x16xf32, #tpu.memory_space<vmem>>, vector<1x16xf32>
    %cst_21 = arith.constant 5.000000e-01 : f32
    %30 = vector.broadcast %cst_21 : f32 to vector<1x16xf32>
    %31 = arith.cmpf ogt, %29, %30 : vector<1x16xf32>
    %32 = vector.shape_cast %31 : vector<1x16xi1> to vector<1x16xi1>
    %33 = vector.broadcast %32 : vector<1x16xi1> to vector<8x16xi1>
    %34 = arith.select %33, %20, %28 : vector<8x16xi1>, vector<8x16xf32>
    %c0_22 = arith.constant 0 : index
    %c0_23 = arith.constant 0 : index
    %35 = vector.load %arg9[%c0_22, %c0_23] : memref<8x16xf32, #tpu.memory_space<vmem>>, vector<8x16xf32>
    tpu.vector_store %arg9[%c0_22, %c0_23], %34 {strides = array<i32>} : memref<8x16xf32, #tpu.memory_space<vmem>>, vector<8x16xf32>,
    return
  }
  func.func @transform_0(%arg0: i32) -> (i32, i32) {
    %c0_i32 = arith.constant 0 : i32
    %c0_i32_0 = arith.constant 0 : i32
    return %arg0, %c0_i32 : i32, i32
  }
  func.func @transform_1(%arg0: i32) -> (i32, i32) {
    %c0_i32 = arith.constant 0 : i32
    %c0_i32_0 = arith.constant 0 : i32
    %c0_i32_1 = arith.constant 0 : i32
    return %c0_i32, %c0_i32_0 : i32, i32
  }
  func.func @transform_2(%arg0: i32) -> (i32, i32) {
    %c0_i32 = arith.constant 0 : i32
    %c0_i32_0 = arith.constant 0 : i32
    %c0_i32_1 = arith.constant 0 : i32
    return %c0_i32, %c0_i32_0 : i32, i32
  }
  func.func @transform_3(%arg0: i32) -> (i32, i32) {
    %c0_i32 = arith.constant 0 : i32
    %c0_i32_0 = arith.constant 0 : i32
    %c0_i32_1 = arith.constant 0 : i32
    return %c0_i32, %c0_i32_0 : i32, i32
  }
  func.func @transform_4(%arg0: i32) -> (i32, i32) {
    %c0_i32 = arith.constant 0 : i32
    %c0_i32_0 = arith.constant 0 : i32
    %c0_i32_1 = arith.constant 0 : i32
    return %c0_i32, %c0_i32_0 : i32, i32
  }
  func.func @transform_5(%arg0: i32) -> (i32, i32) {
    %c0_i32 = arith.constant 0 : i32
    %c0_i32_0 = arith.constant 0 : i32
    %c0_i32_1 = arith.constant 0 : i32
    return %c0_i32, %c0_i32_0 : i32, i32
  }
  func.func @transform_6(%arg0: i32) -> (i32, i32) {
    %c0_i32 = arith.constant 0 : i32
    %c0_i32_0 = arith.constant 0 : i32
    %c0_i32_1 = arith.constant 0 : i32
    return %c0_i32, %c0_i32_0 : i32, i32
  }
  func.func @transform_7(%arg0: i32) -> (i32, i32) {
    %c0_i32 = arith.constant 0 : i32
    %c0_i32_0 = arith.constant 0 : i32
    %c0_i32_1 = arith.constant 0 : i32
    return %c0_i32, %c0_i32_0 : i32, i32
  }
  func.func @transform_8(%arg0: i32) -> (i32, i32) {
    %c0_i32 = arith.constant 0 : i32
    %c0_i32_0 = arith.constant 0 : i32
    return %arg0, %c0_i32 : i32, i32
  }
}

</mosaic_0001>

<llo_original>
// kernel: policy_net_forward.1
$region0: #{policy_net_forward.1}
  #allocation0 [shape = 'u32[]', space=smem, size = 0x4, offset = 0x4, fixed_abs, tag = 'smem constant byte address 0x4 - core index']
  #allocation1 [shape = 'u32[144,128]{1,0:T(1,128)}', space=vmem, size = 0x12000, scoped, tag = 'internal scratch']
  %s0 = inlined_call_operand.vmem [shape: f32[8,16], index: 0, kind: input, shape index: {}]
  %s1 = inlined_call_operand.vmem [shape: f32[16,32], index: 1, kind: input, shape index: {}]
  %s2 = inlined_call_operand.vmem [shape: f32[1,32], index: 2, kind: input, shape index: {}]
  %s3 = inlined_call_operand.vmem [shape: f32[32,32], index: 3, kind: input, shape index: {}]
  %s4 = inlined_call_operand.vmem [shape: f32[1,32], index: 4, kind: input, shape index: {}]
  %s5 = inlined_call_operand.vmem [shape: f32[32,16], index: 5, kind: input, shape index: {}]
  %s6 = inlined_call_operand.hbm [shape: f32[1,16], index: 6, kind: input, shape index: {}]
  %s7 = inlined_call_operand.hbm [shape: f32[1,16], index: 7, kind: input, shape index: {}]
  %s8 = inlined_call_operand.vmem [shape: f32[8,16], index: 8, kind: output, shape index: {}]
  %s9 = sld [smem:[#allocation0]]
  $region50: #{policy_net_forward.1} parent=0
    _
  %s11 = ssub.s32 1, %s9
  %s12 = scalar_select 0, %s11, %s9
  $region1: #{policy_net_forward.1} parent=0
    #allocation2 [shape = 'u8[512]{0}', space=vmem, size = 0x400, scoped, tag = 'input window, operand 6, single buffered']
    #allocation3 [shape = 's32[1]{0}', space=sflag, size = 0x4, scoped, tag = 'scoped memory for policy_net_forward.1']
    #allocation4 [shape = 'u8[512]{0}', space=vmem, size = 0x400, scoped, tag = 'input window, operand 7, single buffered']
    #allocation5 [shape = 's32[1]{0}', space=sflag, size = 0x4, scoped, tag = 'scoped memory for policy_net_forward.1']
    %13 = vsyncpa [#allocation3], 0
    %14 = vsyncpa [#allocation5], 0
    // Predicated region
    $region2: #{policy_net_forward.1} parent=1 // pred_check
      _
    $region3: #{policy_net_forward.1} parent=1 // pred_check_branch
      %16 = sbr.rel (0) target = $region5
    $region4: #{policy_net_forward.1} parent=1 // pred_region
      _
    $region5: #{policy_net_forward.1} parent=1 // pred_fallthru
      _
    // Predicated region
    $region6: #{policy_net_forward.1} parent=1 // pred_check
      _
    $region7: #{policy_net_forward.1} parent=1 // pred_check_branch
      %18 = sbr.rel (0) target = $region9
    $region8: #{policy_net_forward.1} parent=1 // pred_region
      _
    $region9: #{policy_net_forward.1} parent=1 // pred_fallthru
      _
    // Predicated region
    $region10: #{policy_net_forward.1} parent=1 // pred_check
      _
    $region11: #{policy_net_forward.1} parent=1 // pred_check_branch
      %20 = sbr.rel (0) target = $region13
    $region12: #{policy_net_forward.1} parent=1 // pred_region
      _
    $region13: #{policy_net_forward.1} parent=1 // pred_fallthru
      _
    // Predicated region
    $region14: #{policy_net_forward.1} parent=1 // pred_check
      _
    $region15: #{policy_net_forward.1} parent=1 // pred_check_branch
      %22 = sbr.rel (0) target = $region17
    $region16: #{policy_net_forward.1} parent=1 // pred_region
      _
    $region17: #{policy_net_forward.1} parent=1 // pred_fallthru
      _
    // Predicated region
    $region18: #{policy_net_forward.1} parent=1 // pred_check
      _
    $region19: #{policy_net_forward.1} parent=1 // pred_check_branch
      %24 = sbr.rel (0) target = $region21
    $region20: #{policy_net_forward.1} parent=1 // pred_region
      _
    $region21: #{policy_net_forward.1} parent=1 // pred_fallthru
      _
    // Predicated region
    $region22: #{policy_net_forward.1} parent=1 // pred_check
      _
    $region23: #{policy_net_forward.1} parent=1 // pred_check_branch
      %26 = sbr.rel (0) target = $region25
    $region24: #{policy_net_forward.1} parent=1 // pred_region
      _
    $region25: #{policy_net_forward.1} parent=1 // pred_fallthru
      _
    // Predicated region
    $region26: #{policy_net_forward.1} parent=1 // pred_check
      _
    $region27: #{policy_net_forward.1} parent=1 // pred_check_branch
      %28 = sbr.rel (0) target = $region29
    $region28: #{policy_net_forward.1} parent=1 // pred_region
      %s30 = ssub.s32 16, 16
      %31 = vsyncadd [#allocation3], %s30
      %s33 = sshll.u32 [#allocation2], 4
      %s34 = int_to_ptr.vmem [resolvable:$true] %s33
      %36 = dma.hbm_to_vmem [thread:$0]  %s6, 16, %s34, [#allocation3]
    $region29: #{policy_net_forward.1} parent=1 // pred_fallthru
      _
    // Predicated region
    $region30: #{policy_net_forward.1} parent=1 // pred_check
      _
    $region31: #{policy_net_forward.1} parent=1 // pred_check_branch
      %38 = sbr.rel (0) target = $region33
    $region32: #{policy_net_forward.1} parent=1 // pred_region
      %s40 = ssub.s32 16, 16
      %41 = vsyncadd [#allocation5], %s40
      %s43 = sshll.u32 [#allocation4], 4
      %s44 = int_to_ptr.vmem [resolvable:$true] %s43
      %46 = dma.hbm_to_vmem [thread:$0]  %s7, 16, %s44, [#allocation5]
    $region33: #{policy_net_forward.1} parent=1 // pred_fallthru
      _
    // Predicated region
    $region34: #{policy_net_forward.1} parent=1 // pred_check
      _
    $region35: #{policy_net_forward.1} parent=1 // pred_check_branch
      %48 = sbr.rel (0) target = $region37
    $region36: #{policy_net_forward.1} parent=1 // pred_region
      %49 = dma.done [#allocation3], 16
    $region37: #{policy_net_forward.1} parent=1 // pred_fallthru
      _
    // Predicated region
    $region38: #{policy_net_forward.1} parent=1 // pred_check
      _
    $region39: #{policy_net_forward.1} parent=1 // pred_check_branch
      %51 = sbr.rel (0) target = $region41
    $region40: #{policy_net_forward.1} parent=1 // pred_region
      %52 = dma.done [#allocation5], 16
    $region41: #{policy_net_forward.1} parent=1 // pred_fallthru
      _
    %v53 = vld [vmem:[%s0] sm:$0xff]
    %v54 = vld [vmem:[%s1] sm:$0xff]
    %v55 = vld [vmem:[%s1 + $0x8] sm:$0xff]
    %v56 = vld [vmem:[%s2] sm:$0x1]
    %v58 = vlaneseq
    %v59 = vshrl.u32 %v58, 7
    %v60 = vsub.s32 0, %v59
    %v61 = vrot.slane %v56, %v60
    %vm63 = vcmask 130048
    %v65 = vsel %vm63, %v53, 0
    %67 = vmatprep.subr.mxu0 0.0
    %68 = vmatpush1.msra.mxu0 0.0
    %69 = vmatprep.subr.mxu0 0.0
    %70 = vmatpush1.msra.mxu0 0.0
    %71 = vmatprep.subr.mxu0 0.0
    %72 = vmatpush1.msra.mxu0 0.0
    %73 = vmatprep.subr.mxu0 0.0
    %74 = vmatpush1.msra.mxu0 0.0
    %75 = vmatprep.subr.mxu0 0.0
    %76 = vmatpush1.msra.mxu0 0.0
    %77 = vmatprep.subr.mxu0 0.0
    %78 = vmatpush1.msra.mxu0 0.0
    %79 = vmatprep.subr.mxu0 0.0
    %80 = vmatpush1.msra.mxu0 0.0
    %81 = vmatprep.subr.mxu0 0.0
    %82 = vmatpush1.msra.mxu0 0.0
    %83 = vmatprep.subr.mxu0 0.0
    %84 = vmatpush1.msra.mxu0 0.0
    %85 = vmatprep.subr.mxu0 0.0
    %86 = vmatpush1.msra.mxu0 0.0
    %87 = vmatprep.subr.mxu0 0.0
    %88 = vmatpush1.msra.mxu0 0.0
    %89 = vmatprep.subr.mxu0 0.0
    %90 = vmatpush1.msra.mxu0 0.0
    %91 = vmatprep.subr.mxu0 0.0
    %92 = vmatpush1.msra.mxu0 0.0
    %93 = vmatprep.subr.mxu0 0.0
    %94 = vmatpush1.msra.mxu0 0.0
    %95 = vmatprep.subr.mxu0 0.0
    %96 = vmatpush1.msra.mxu0 %v55
    %97 = vmatprep.subr.mxu0 0.0
    %98 = vmatpush1.msra.mxu0 %v54
    %99 = vmatprep.subr.mxu0 0.0
    %100 = vmatpush2.msra.mxu0 0.0
    %101 = vmatprep.subr.mxu0 0.0
    %102 = vmatpush2.msra.mxu0 0.0
    %103 = vmatprep.subr.mxu0 0.0
    %104 = vmatpush2.msra.mxu0 0.0
    %105 = vmatprep.subr.mxu0 0.0
    %106 = vmatpush2.msra.mxu0 0.0
    %107 = vmatprep.subr.mxu0 0.0
    %108 = vmatpush2.msra.mxu0 0.0
    %109 = vmatprep.subr.mxu0 0.0
    %110 = vmatpush2.msra.mxu0 0.0
    %111 = vmatprep.subr.mxu0 0.0
    %112 = vmatpush2.msra.mxu0 0.0
    %113 = vmatprep.subr.mxu0 0.0
    %114 = vmatpush2.msra.mxu0 0.0
    %115 = vmatprep.subr.mxu0 0.0
    %116 = vmatpush2.msra.mxu0 0.0
    %117 = vmatprep.subr.mxu0 0.0
    %118 = vmatpush2.msra.mxu0 0.0
    %119 = vmatprep.subr.mxu0 0.0
    %120 = vmatpush2.msra.mxu0 0.0
    %121 = vmatprep.subr.mxu0 0.0
    %122 = vmatpush2.msra.mxu0 0.0
    %123 = vmatprep.subr.mxu0 0.0
    %124 = vmatpush2.msra.mxu0 0.0
    %125 = vmatprep.subr.mxu0 0.0
    %126 = vmatpush2.msra.mxu0 0.0
    %127 = vmatprep.subr.mxu0 0.0
    %128 = vmatpush2.msra.mxu0 0.0
    %129 = vmatprep.subr.mxu0 0.0
    %130 = vmatpush2.msra.mxu0 0.0
    %131 = vmatprep.mubr.f32.mxu0 0.0
    %132 = vmatmul.mubr.f32.gmra.mxu0 %v65
    %v133 = vpop.f32.mrf.mxu0
    %v134 = vadd.f32 %v61, %v133
    %v135 = vpop.f32.mrf.mxu0
    %136 = vdwg.mxu0
    %v137 = vmax.f32 %v134, 0.0
    %v138 = vld [vmem:[%s3] sm:$0xff]
    %v139 = vld [vmem:[%s3 + $0x8] sm:$0xff]
    %v140 = vld [vmem:[%s3 + $0x10] sm:$0xff]
    %v141 = vld [vmem:[%s3 + $0x18] sm:$0xff]
    %v142 = vld [vmem:[%s4] sm:$0x1]
    %v144 = vlaneseq
    %v145 = vshrl.u32 %v144, 7
    %v146 = vsub.s32 0, %v145
    %v147 = vrot.slane %v142, %v146
    %vm149 = vcmask 261120
    %v151 = vsel %vm149, %v137, 0
    %153 = vmatprep.subr.mxu0 0.0
    %154 = vmatpush1.msra.mxu0 0.0
    %155 = vmatprep.subr.mxu0 0.0
    %156 = vmatpush1.msra.mxu0 0.0
    %157 = vmatprep.subr.mxu0 0.0
    %158 = vmatpush1.msra.mxu0 0.0
    %159 = vmatprep.subr.mxu0 0.0
    %160 = vmatpush1.msra.mxu0 0.0
    %161 = vmatprep.subr.mxu0 0.0
    %162 = vmatpush1.msra.mxu0 0.0
    %163 = vmatprep.subr.mxu0 0.0
    %164 = vmatpush1.msra.mxu0 0.0
    %165 = vmatprep.subr.mxu0 0.0
    %166 = vmatpush1.msra.mxu0 0.0
    %167 = vmatprep.subr.mxu0 0.0
    %168 = vmatpush1.msra.mxu0 0.0
    %169 = vmatprep.subr.mxu0 0.0
    %170 = vmatpush1.msra.mxu0 0.0
    %171 = vmatprep.subr.mxu0 0.0
    %172 = vmatpush1.msra.mxu0 0.0
    %173 = vmatprep.subr.mxu0 0.0
    %174 = vmatpush1.msra.mxu0 0.0
    %175 = vmatprep.subr.mxu0 0.0
    %176 = vmatpush1.msra.mxu0 0.0
    %177 = vmatprep.subr.mxu0 0.0
    %178 = vmatpush1.msra.mxu0 %v141
    %179 = vmatprep.subr.mxu0 0.0
    %180 = vmatpush1.msra.mxu0 %v140
    %181 = vmatprep.subr.mxu0 0.0
    %182 = vmatpush1.msra.mxu0 %v139
    %183 = vmatprep.subr.mxu0 0.0
    %184 = vmatpush1.msra.mxu0 %v138
    %185 = vmatprep.subr.mxu0 0.0
    %186 = vmatpush2.msra.mxu0 0.0
    %187 = vmatprep.subr.mxu0 0.0
    %188 = vmatpush2.msra.mxu0 0.0
    %189 = vmatprep.subr.mxu0 0.0
    %190 = vmatpush2.msra.mxu0 0.0
    %191 = vmatprep.subr.mxu0 0.0
    %192 = vmatpush2.msra.mxu0 0.0
    %193 = vmatprep.subr.mxu0 0.0
    %194 = vmatpush2.msra.mxu0 0.0
    %195 = vmatprep.subr.mxu0 0.0
    %196 = vmatpush2.msra.mxu0 0.0
    %197 = vmatprep.subr.mxu0 0.0
    %198 = vmatpush2.msra.mxu0 0.0
    %199 = vmatprep.subr.mxu0 0.0
    %200 = vmatpush2.msra.mxu0 0.0
    %201 = vmatprep.subr.mxu0 0.0
    %202 = vmatpush2.msra.mxu0 0.0
    %203 = vmatprep.subr.mxu0 0.0
    %204 = vmatpush2.msra.mxu0 0.0
    %205 = vmatprep.subr.mxu0 0.0
    %206 = vmatpush2.msra.mxu0 0.0
    %207 = vmatprep.subr.mxu0 0.0
    %208 = vmatpush2.msra.mxu0 0.0
    %209 = vmatprep.subr.mxu0 0.0
    %210 = vmatpush2.msra.mxu0 0.0
    %211 = vmatprep.subr.mxu0 0.0
    %212 = vmatpush2.msra.mxu0 0.0
    %213 = vmatprep.subr.mxu0 0.0
    %214 = vmatpush2.msra.mxu0 0.0
    %215 = vmatprep.subr.mxu0 0.0
    %216 = vmatpush2.msra.mxu0 0.0
    %217 = vmatprep.mubr.f32.mxu0 0.0
    %218 = vmatmul.mubr.f32.gmra.mxu0 %v151
    %v219 = vpop.f32.mrf.mxu0
    %v220 = vadd.f32 %v147, %v219
    %v221 = vpop.f32.mrf.mxu0
    %222 = vdwg.mxu0
    %v223 = vmax.f32 %v220, 0.0
    %v224 = vld [vmem:[%s5] sm:$0xff]
    %v225 = vld [vmem:[%s5 + $0x8] sm:$0xff]
    %v226 = vld [vmem:[%s5 + $0x10] sm:$0xff]
    %v227 = vld [vmem:[%s5 + $0x18] sm:$0xff]
    %v228 = vld [vmem:[#allocation2] sm:$0x1]
    %v230 = vlaneseq
    %v231 = vshrl.u32 %v230, 7
    %v232 = vsub.s32 0, %v231
    %v233 = vrot.slane %v228, %v232
    %v236 = vsel %vm149, %v223, 0
    %238 = vmatprep.subr.mxu0 0.0
    %239 = vmatpush1.msra.mxu0 0.0
    %240 = vmatprep.subr.mxu0 0.0
    %241 = vmatpush1.msra.mxu0 0.0
    %242 = vmatprep.subr.mxu0 0.0
    %243 = vmatpush1.msra.mxu0 0.0
    %244 = vmatprep.subr.mxu0 0.0
    %245 = vmatpush1.msra.mxu0 0.0
    %246 = vmatprep.subr.mxu0 0.0
    %247 = vmatpush1.msra.mxu0 0.0
    %248 = vmatprep.subr.mxu0 0.0
    %249 = vmatpush1.msra.mxu0 0.0
    %250 = vmatprep.subr.mxu0 0.0
    %251 = vmatpush1.msra.mxu0 0.0
    %252 = vmatprep.subr.mxu0 0.0
    %253 = vmatpush1.msra.mxu0 0.0
    %254 = vmatprep.subr.mxu0 0.0
    %255 = vmatpush1.msra.mxu0 0.0
    %256 = vmatprep.subr.mxu0 0.0
    %257 = vmatpush1.msra.mxu0 0.0
    %258 = vmatprep.subr.mxu0 0.0
    %259 = vmatpush1.msra.mxu0 0.0
    %260 = vmatprep.subr.mxu0 0.0
    %261 = vmatpush1.msra.mxu0 0.0
    %262 = vmatprep.subr.mxu0 0.0
    %263 = vmatpush1.msra.mxu0 %v227
    %264 = vmatprep.subr.mxu0 0.0
    %265 = vmatpush1.msra.mxu0 %v226
    %266 = vmatprep.subr.mxu0 0.0
    %267 = vmatpush1.msra.mxu0 %v225
    %268 = vmatprep.subr.mxu0 0.0
    %269 = vmatpush1.msra.mxu0 %v224
    %270 = vmatprep.subr.mxu0 0.0
    %271 = vmatpush2.msra.mxu0 0.0
    %272 = vmatprep.subr.mxu0 0.0
    %273 = vmatpush2.msra.mxu0 0.0
    %274 = vmatprep.subr.mxu0 0.0
    %275 = vmatpush2.msra.mxu0 0.0
    %276 = vmatprep.subr.mxu0 0.0
    %277 = vmatpush2.msra.mxu0 0.0
    %278 = vmatprep.subr.mxu0 0.0
    %279 = vmatpush2.msra.mxu0 0.0
    %280 = vmatprep.subr.mxu0 0.0
    %281 = vmatpush2.msra.mxu0 0.0
    %282 = vmatprep.subr.mxu0 0.0
    %283 = vmatpush2.msra.mxu0 0.0
    %284 = vmatprep.subr.mxu0 0.0
    %285 = vmatpush2.msra.mxu0 0.0
    %286 = vmatprep.subr.mxu0 0.0
    %287 = vmatpush2.msra.mxu0 0.0
    %288 = vmatprep.subr.mxu0 0.0
    %289 = vmatpush2.msra.mxu0 0.0
    %290 = vmatprep.subr.mxu0 0.0
    %291 = vmatpush2.msra.mxu0 0.0
    %292 = vmatprep.subr.mxu0 0.0
    %293 = vmatpush2.msra.mxu0 0.0
    %294 = vmatprep.subr.mxu0 0.0
    %295 = vmatpush2.msra.mxu0 0.0
    %296 = vmatprep.subr.mxu0 0.0
    %297 = vmatpush2.msra.mxu0 0.0
    %298 = vmatprep.subr.mxu0 0.0
    %299 = vmatpush2.msra.mxu0 0.0
    %300 = vmatprep.subr.mxu0 0.0
    %301 = vmatpush2.msra.mxu0 0.0
    %302 = vmatprep.mubr.f32.mxu0 0.0
    %303 = vmatmul.mubr.f32.gmra.mxu0 %v236
    %v304 = vpop.f32.mrf.mxu0
    %v305 = vadd.f32 %v233, %v304
    %v306 = vpop.f32.mrf.mxu0
    %307 = vdwg.mxu0
    %v308 = vtanh.pop %v305
    %v309 = vmax.f32 %v305, 0.0
    %v310 = vand.u32 2147483647, %v305
    %v311 = vsub.f32 0.0, %v310
    %v312 = vmul.f32 %v311, 1.442695
    %v313 = vpow.pop %v312
    %v314 = vadd.f32 %v313, 1.0
    %v315 = vlog2.pop %v314
    %v316 = vmul.f32 %v315, 0.6931472
    %v317 = vmul.f32 -0.5, %v313
    %v318 = vadd.f32 %v317, 1.0
    %v319 = vmul.f32 %v318, %v313
    %v320 = vand.u32 2147483647, %v313
    %vm321 = vcmp.lt.f32.partialorder %v320, 0.0004427343
    %v322 = vsel %vm321, %v319, %v316
    %v323 = vadd.f32 %v309, %v322
    %v324 = vld [vmem:[#allocation4] sm:$0x1]
    %vm325 = vcmp.gt.f32.partialorder %v324, 0.5
    %v326 = vsel %vm325, 1, 0
    %v327 = vlaneseq
    %v328 = vshrl.u32 %v327, 7
    %v329 = vsub.s32 0, %v328
    %v330 = vrot.slane %v326, %v329
    %vm331 = vcmp.eq.s32.totalorder %v330, 1
    %v332 = vsel %vm331, %v308, %v323
    %333 = vst.msk [vmem:[%s8] sm:$0xff] %vm63, %v332
    // Predicated region
    $region42: #{policy_net_forward.1} parent=1 // pred_check
      _
    $region43: #{policy_net_forward.1} parent=1 // pred_check_branch
      %335 = sbr.rel (0) target = $region45
    $region44: #{policy_net_forward.1} parent=1 // pred_region
      _
    $region45: #{policy_net_forward.1} parent=1 // pred_fallthru
      _
    // Predicated region
    $region46: #{policy_net_forward.1} parent=1 // pred_check
      _
    $region47: #{policy_net_forward.1} parent=1 // pred_check_branch
      %337 = sbr.rel (0) target = $region49
    $region48: #{policy_net_forward.1} parent=1 // pred_region
      _
    $region49: #{policy_net_forward.1} parent=1 // pred_fallthru
      _
    %338 = vsyncpa [#allocation3], 1
    %339 = vsyncpa [#allocation5], 1

</llo_original>
